<compile_context>
chip_gen: v7x
topology: tpu7x:2x2x1
jax: 0.10.0
libtpu: 0.0.40
codegen_flags: <defaults>
</compile_context>

<pallas_src>
import functools

import jax
import jax.numpy as jnp
from jax.experimental import pallas as pl
from jax.experimental.pallas import tpu as pltpu


def _patch_prune_kernel(scores_ref, x_ref, xo_ref, idx_ref, sel_ref, *,
                        num_prefix, num_keep, num_slots):
    """Prunes `Bt` batch rows per (batch-block, D-block) grid step.

    scores_ref : (Bt, 1, T)        f32, prefix positions already hold +inf
    x_ref      : (Bt, T, Dt)       input tokens (one hidden tile)
    xo_ref     : (Bt, Kpad, Dt)    output tokens (prefix + kept patches, padded)
    idx_ref    : (Bt, 1, K)        kept patch indices (ascending, int32)
    sel_ref    : (Bt, Kpad, T)     VMEM scratch: one-hot selection, x dtype
    """
    P = num_prefix
    K = num_keep
    Kout = P + K          # tokens actually kept (prefix + patches)
    Kpad = num_slots      # sublane-padded output rows
    Bt, T, _ = x_ref.shape

    # Selection depends only on the batch block -> compute once per batch block
    # (first D tile) and reuse the scratch for the remaining hidden tiles.
    @pl.when(pl.program_id(1) == 0)
    def _build_selection():
        s = scores_ref[:, 0, :]                                    # (Bt, T) f32
        sk = s[:, None, :]                                         # competitor k
        sj = s[:, :, None]                                         # query j
        r = jax.lax.broadcasted_iota(jnp.int32, (T, T), 0)         # dim-0 index
        c = jax.lax.broadcasted_iota(jnp.int32, (T, T), 1)         # dim-1 index

        # before[b, j, k]: token k ranks strictly before token j
        # (descending score, ties break toward the lower token index).
        before = (sk > sj) | ((sk == sj) & (c < r)[None])          # (Bt, T, T)
        rank = jnp.sum(before.astype(jnp.int32), axis=-1)          # (Bt, T)
        keep = rank < Kout                                         # (Bt, T)

        # Output slot of each kept token = exclusive prefix count of `keep`.
        # One MXU matvec against a strict upper-triangular matrix (M[k, j] = k<j);
        # integer counts <= T are exact in f32.  Replaces the log-step shift scan.
        upper = (r < c).astype(jnp.float32)                        # (T, T)
        pos = jnp.einsum('bk,kj->bj', keep.astype(jnp.float32), upper,
                         preferred_element_type=jnp.float32).astype(jnp.int32)

        slot_ids = jax.lax.broadcasted_iota(jnp.int32, (Kpad, T), 0)
        tok_ids = jax.lax.broadcasted_iota(jnp.int32, (Kpad, T), 1)
        onehot = keep[:, None, :] & (pos[:, None, :] == slot_ids[None])

        # Kept patch indices (slots P.. hold patch tokens, ascending by index).
        tok_sel = jnp.sum(jnp.where(onehot, tok_ids[None], 0), axis=-1)  # (Bt,Kpad)
        idx_ref[...] = (tok_sel[:, P:Kout] - P)[:, None, :]

        # One-hot in the input dtype (0/1 exact) -> fast MXU path for bf16.
        sel_ref[...] = onehot.astype(sel_ref.dtype)

    # Prefix + kept patches via a single MXU matmul: one full-block,
    # sublane-aligned, lane-dense store per D tile. f32 accumulation is exact
    # (exactly one nonzero coefficient per output row).
    out = jnp.einsum('bkt,btd->bkd', sel_ref[...], x_ref[...],
                     preferred_element_type=jnp.float32)
    xo_ref[...] = out.astype(xo_ref.dtype)


def _vmem_capacity_bytes():
    try:
        return int(pltpu.get_tpu_info().vmem_capacity_bytes)
    except Exception:
        return 64 * 1024 * 1024      # v7x-safe fallback


def _per_row_vmem(T, Dt, Kpad, K, itemsize):
    """Per-batch-row VMEM cost for one grid step (pipeline buffers + temps)."""
    return (2 * T * Dt * itemsize          # double-buffered x tile
            + 2 * Kpad * Dt * itemsize     # double-buffered output tile
            + 2 * T * 4 + 2 * K * 4        # scores / idx tiles (tiny)
            + Kpad * T * itemsize          # one-hot selection scratch
            + 4 * T * T * 4                # (T, T) rank temporaries
            + 3 * Kpad * T * 4             # one-hot / tok_sel temporaries
            + Kpad * Dt * 4)               # f32 matmul accumulator


def _choose_tiling(B, T, D, Kpad, K, itemsize, d_tile=None):
    """Pick (Bt, Dt, vmem_limit) from the hardware VMEM capacity."""
    vmem_cap = _vmem_capacity_bytes()
    # Leave headroom for compiler scratch: 48 MiB on v7x (64 MiB/TC),
    # 96 MiB on v5e/v6e (128 MiB/TC).
    vmem_limit = max(32 << 20, min(vmem_cap * 3 // 4, vmem_cap - (16 << 20)))
    budget = int(vmem_limit * 0.8)

    if d_tile is not None:
        d_candidates = [d_tile]
    else:
        d_candidates = [D]
        if D > 512 and D % 128 == 0:
            d_candidates += [dt for dt in (512, 256, 128) if D % dt == 0]

    min_rows = 8
    Dt, Bt = d_candidates[0], 1
    for dt in d_candidates:
        bt = max(1, budget // _per_row_vmem(T, dt, Kpad, K, itemsize))
        Dt, Bt = dt, bt
        if bt >= min_rows:
            break

    Bt = min(Bt, B)
    nb = -(-B // Bt)
    if B >= 2:
        nb = max(nb, 2)          # >= 2 grid steps: v7x megacore + pipelining
    Bt = -(-B // nb)             # balance blocks (last block waste minimized)
    return Bt, Dt, int(vmem_limit)


def patch_pruning(x, mask, *, keep_ratio=0.5, num_prefix_tokens=1, num_keep=None,
                  ordered=True, return_indices=True, d_tile=None):
    """JAX/Pallas equivalent of PatchPruning.forward.

    x    : [B, T, D]  (T = num_prefix_tokens + N)
    mask : [B, N]
    """
    if num_keep is None and keep_ratio == 1.0:
        return x                 # matches the PyTorch module (no pruning, no indices)

    B, T, D = x.shape
    P = num_prefix_tokens
    N = T - P
    assert mask.shape == (B, N), (mask.shape, (B, N))
    assert ordered, "kernel emits indices in ascending order (ordered=True)"

    if num_keep is None:
        K = max(1, int(N * keep_ratio))
    else:
        K = max(1, int(num_keep))
    K = min(K, N)                # torch's `[:, :num_keep]` clamps at N
    Kout = P + K

    itemsize = jnp.dtype(x.dtype).itemsize
    sub = max(8, 32 // itemsize)                 # sublane multiple for x dtype
    Kout_pad = -(-Kout // sub) * sub             # dense sublane stores

    # Pre-pad the per-token scores with +inf for the prefix positions in the
    # wrapper (tiny XLA op) so the kernel needs no lane-axis concat.
    scores = mask.astype(jnp.float32)
    if P > 0:
        scores = jnp.concatenate(
            [jnp.full((B, P), jnp.inf, jnp.float32), scores], axis=-1)
    scores = scores.reshape(B, 1, T)

    Bt, Dt, vmem_limit = _choose_tiling(B, T, D, Kout_pad, K, itemsize, d_tile)
    assert D % Dt == 0
    grid_b = -(-B // Bt)         # Bt need not divide B (OOB rows are discarded)
    grid_d = D // Dt

    kernel = functools.partial(_patch_prune_kernel, num_prefix=P, num_keep=K,
                               num_slots=Kout_pad)

    out_x, out_idx = pl.pallas_call(
        kernel,
        out_shape=(
            jax.ShapeDtypeStruct((B, Kout_pad, D), x.dtype),
            jax.ShapeDtypeStruct((B, 1, K), jnp.int32),
        ),
        grid_spec=pltpu.PrefetchScalarGridSpec(
            num_scalar_prefetch=0,
            grid=(grid_b, grid_d),
            in_specs=[
                pl.BlockSpec((Bt, 1, T), lambda b, d: (b, 0, 0)),
                pl.BlockSpec((Bt, T, Dt), lambda b, d: (b, 0, d)),
            ],
            out_specs=[
                pl.BlockSpec((Bt, Kout_pad, Dt), lambda b, d: (b, 0, d)),
                pl.BlockSpec((Bt, 1, K), lambda b, d: (b, 0, 0)),
            ],
            scratch_shapes=[pltpu.VMEM((Bt, Kout_pad, T), x.dtype)],
        ),
        compiler_params=pltpu.CompilerParams(
            # D axis reuses the per-batch-block selection scratch -> arbitrary.
            dimension_semantics=("parallel", "arbitrary"),
            vmem_limit_bytes=vmem_limit,
        ),
    )(scores, x)

    if Kout_pad != Kout:
        out_x = out_x[:, :Kout]          # consumer fusion absorbs this slice
    keep_indices = out_idx.reshape(B, K)
    if return_indices:
        return out_x, keep_indices
    return out_x


def _reference(x, mask, keep_ratio, num_prefix_tokens):
    """Pure-JAX reference mirroring the PyTorch forward."""
    prefix, patches = x[:, :num_prefix_tokens], x[:, num_prefix_tokens:]
    N = patches.shape[1]
    num_keep = max(1, int(N * keep_ratio))
    keep_indices = jnp.argsort(-mask, axis=-1)[:, :num_keep]   # stable desc sort
    keep_indices = jnp.sort(keep_indices, axis=-1)             # ordered=True
    gathered = jnp.take_along_axis(patches, keep_indices[..., None], axis=1)
    out = jnp.concatenate([prefix, gathered], axis=1)
    return out, keep_indices


if __name__ == "__main__":
    key = jax.random.PRNGKey(0)
    k1, k2, k3, k4 = jax.random.split(key, 4)

    # ---- Test 1: small f32, single D tile -----------------------------------
    B, P, N, D = 2, 1, 8, 32
    T = P + N
    keep_ratio = 0.5
    x = jax.random.normal(k1, (B, T, D), dtype=jnp.float32)
    mask = jax.random.normal(k2, (B, N), dtype=jnp.float32)

    out_x, out_idx = patch_pruning(x, mask, keep_ratio=keep_ratio,
                                   num_prefix_tokens=P)
    jax.block_until_ready(out_x)
    jax.block_until_ready(out_idx)

    ref_x, ref_idx = _reference(x, mask, keep_ratio, P)
    assert out_x.shape == ref_x.shape, (out_x.shape, ref_x.shape)
    assert jnp.array_equal(out_idx, ref_idx.astype(jnp.int32)), (out_idx, ref_idx)
    assert jnp.allclose(out_x, ref_x, atol=1e-5, rtol=1e-5)

    # ---- Test 2: bf16, non-divisible batch, forced D tiling (scratch reuse) --
    B2, P2, N2, D2 = 3, 1, 24, 256
    T2 = P2 + N2
    x2 = jax.random.normal(k3, (B2, T2, D2), dtype=jnp.bfloat16)
    mask2 = jax.random.normal(k4, (B2, N2), dtype=jnp.float32)

    out_x2, out_idx2 = patch_pruning(x2, mask2, keep_ratio=keep_ratio,
                                     num_prefix_tokens=P2, d_tile=128)
    jax.block_until_ready(out_x2)
    jax.block_until_ready(out_idx2)

    ref_x2, ref_idx2 = _reference(x2, mask2, keep_ratio, P2)
    assert out_x2.shape == ref_x2.shape, (out_x2.shape, ref_x2.shape)
    assert jnp.array_equal(out_idx2, ref_idx2.astype(jnp.int32)), (out_idx2, ref_idx2)
    assert jnp.allclose(out_x2.astype(jnp.float32), ref_x2.astype(jnp.float32),
                        atol=1e-2, rtol=1e-2)

    print("KERNEL_OK")
</pallas_src>

<mosaic_0001>
module attributes {stable_mosaic.version = 11 : i64} {
  func.func @_patch_prune_kernel(%arg0: i32, %arg1: i32, %arg2: memref<1x1x9xf32, #tpu.memory_space<vmem>>, %arg3: memref<1x9x32xf32, #tpu.memory_space<vmem>>, %arg4: memref<1x8x32xf32, #tpu.memory_space<vmem>>, %arg5: memref<1x1x4xi32, #tpu.memory_space<vmem>>, %arg6: memref<1x8x9xf32, #tpu.memory_space<vmem>>) attributes {dimension_semantics = [#tpu.dimension_semantics<parallel>, #tpu.dimension_semantics<arbitrary>], iteration_bounds = array<i64: 2, 1>, scalar_prefetch = 0 : i64, scratch_operands = 1 : i64, tpu.core_type = #tpu.core_type<tc>, window_params = [{transform_indices = @transform_0, window_bounds = array<i64: 1, 1, 9>}, {transform_indices = @transform_1, window_bounds = array<i64: 1, 9, 32>}, {transform_indices = @transform_2, window_bounds = array<i64: 1, 8, 32>}, {transform_indices = @transform_3, window_bounds = array<i64: 1, 1, 4>}]} {
    %c0_i32 = arith.constant 0 : i32
    %0 = arith.cmpi eq, %arg1, %c0_i32 : i32
    %1 = arith.extui %0 : i1 to i32
    %c0_i32_0 = arith.constant 0 : i32
    %2 = arith.cmpi ne, %1, %c0_i32_0 : i32
    scf.if %2 {
      %c0_9 = arith.constant 0 : index
      %c0_10 = arith.constant 0 : index
      %c0_11 = arith.constant 0 : index
      %7 = vector.load %arg2[%c0_9, %c0_10, %c0_11] : memref<1x1x9xf32, #tpu.memory_space<vmem>>, vector<1x1x9xf32>
      %8 = vector.shape_cast %7 : vector<1x1x9xf32> to vector<1x9xf32>
      %9 = vector.shape_cast %8 : vector<1x9xf32> to vector<1x1x9xf32>
      %10 = vector.shape_cast %8 : vector<1x9xf32> to vector<1x9x1xf32>
      %11 = tpu.iota {dimensions = array<i32: 0>} : vector<9x9xi32>
      %12 = tpu.iota {dimensions = array<i32: 1>} : vector<9x9xi32>
      %13 = vector.broadcast %9 : vector<1x1x9xf32> to vector<1x9x9xf32>
      %14 = vector.broadcast %10 : vector<1x9x1xf32> to vector<1x9x9xf32>
      %15 = arith.cmpf ogt, %13, %14 : vector<1x9x9xf32>
      %16 = vector.broadcast %9 : vector<1x1x9xf32> to vector<1x9x9xf32>
      %17 = vector.broadcast %10 : vector<1x9x1xf32> to vector<1x9x9xf32>
      %18 = arith.cmpf oeq, %16, %17 : vector<1x9x9xf32>
      %19 = arith.cmpi slt, %12, %11 : vector<9x9xi32>
      %20 = vector.shape_cast %19 : vector<9x9xi1> to vector<1x9x9xi1>
      %21 = arith.andi %18, %20 : vector<1x9x9xi1>
      %22 = arith.ori %15, %21 : vector<1x9x9xi1>
      %23 = arith.extui %22 : vector<1x9x9xi1> to vector<1x9x9xi32>
      %cst_12 = arith.constant dense<0> : vector<1x9xi32>
      %24 = vector.multi_reduction <add>, %23, %cst_12 [2] : vector<1x9x9xi32> to vector<1x9xi32>
      %c5_i32 = arith.constant 5 : i32
      %25 = vector.broadcast %c5_i32 : i32 to vector<1x9xi32>
      %26 = arith.cmpi slt, %24, %25 : vector<1x9xi32>
      %27 = arith.cmpi slt, %11, %12 : vector<9x9xi32>
      %28 = arith.extui %27 : vector<9x9xi1> to vector<9x9xi32>
      %29 = arith.sitofp %28 : vector<9x9xi32> to vector<9x9xf32>
      %30 = arith.extui %26 : vector<1x9xi1> to vector<1x9xi32>
      %31 = arith.sitofp %30 : vector<1x9xi32> to vector<1x9xf32>
      "tpu.trace_start"() <{level = 10 : i32, message = "bk,kj->bj"}> : () -> ()
      %cst_13 = arith.constant dense<0.000000e+00> : vector<1x9xf32>
      %32 = tpu.matmul %31, %29, %cst_13 {dimension_numbers = #tpu.dot_dimension_numbers<[1], [0], [0], [1], [0, 0, 1, 1], [], []>} : vector<1x9xf32>, vector<9x9xf32>, vector<1x9xf32> -> vector<1x9xf32>
      "tpu.trace_stop"() : () -> ()
      %33 = arith.fptosi %32 : vector<1x9xf32> to vector<1x9xi32>
      %34 = tpu.iota {dimensions = array<i32: 0>} : vector<8x9xi32>
      %35 = tpu.iota {dimensions = array<i32: 1>} : vector<8x9xi32>
      %36 = vector.shape_cast %26 : vector<1x9xi1> to vector<1x1x9xi1>
      %37 = vector.shape_cast %33 : vector<1x9xi32> to vector<1x1x9xi32>
      %38 = vector.shape_cast %34 : vector<8x9xi32> to vector<1x8x9xi32>
      %39 = vector.broadcast %37 : vector<1x1x9xi32> to vector<1x8x9xi32>
      %40 = arith.cmpi eq, %39, %38 : vector<1x8x9xi32>
      %41 = vector.broadcast %36 : vector<1x1x9xi1> to vector<1x8x9xi1>
      %42 = arith.andi %41, %40 : vector<1x8x9xi1>
      %43 = vector.shape_cast %35 : vector<8x9xi32> to vector<1x8x9xi32>
      %c0_i32_14 = arith.constant 0 : i32
      %44 = vector.broadcast %c0_i32_14 : i32 to vector<1x8x9xi32>
      %45 = arith.select %42, %43, %44 : vector<1x8x9xi1>, vector<1x8x9xi32>
      %cst_15 = arith.constant dense<0> : vector<1x8xi32>
      %46 = vector.multi_reduction <add>, %45, %cst_15 [2] : vector<1x8x9xi32> to vector<1x8xi32>
      %47 = vector.extract_strided_slice %46 {offsets = [0, 1], sizes = [1, 4], strides = [1, 1]} : vector<1x8xi32> to vector<1x4xi32>
      %c1_i32 = arith.constant 1 : i32
      %48 = vector.broadcast %c1_i32 : i32 to vector<1x4xi32>
      %49 = arith.subi %47, %48 : vector<1x4xi32>
      %50 = vector.shape_cast %49 : vector<1x4xi32> to vector<1x1x4xi32>
      %c0_16 = arith.constant 0 : index
      %c0_17 = arith.constant 0 : index
      %c0_18 = arith.constant 0 : index
      %51 = vector.load %arg5[%c0_16, %c0_17, %c0_18] : memref<1x1x4xi32, #tpu.memory_space<vmem>>, vector<1x1x4xi32>
      tpu.vector_store %arg5[%c0_16, %c0_17, %c0_18], %50 {strides = array<i32>} : memref<1x1x4xi32, #tpu.memory_space<vmem>>, vector<1x1x4xi32>,
      %52 = arith.extui %42 : vector<1x8x9xi1> to vector<1x8x9xi32>
      %53 = arith.sitofp %52 : vector<1x8x9xi32> to vector<1x8x9xf32>
      %c0_19 = arith.constant 0 : index
      %c0_20 = arith.constant 0 : index
      %c0_21 = arith.constant 0 : index
      %54 = vector.load %arg6[%c0_19, %c0_20, %c0_21] : memref<1x8x9xf32, #tpu.memory_space<vmem>>, vector<1x8x9xf32>
      tpu.vector_store %arg6[%c0_19, %c0_20, %c0_21], %53 {strides = array<i32>} : memref<1x8x9xf32, #tpu.memory_space<vmem>>, vector<1x8x9xf32>,
    } else {
    }
    %c0 = arith.constant 0 : index
    %c0_1 = arith.constant 0 : index
    %c0_2 = arith.constant 0 : index
    %3 = vector.load %arg6[%c0, %c0_1, %c0_2] : memref<1x8x9xf32, #tpu.memory_space<vmem>>, vector<1x8x9xf32>
    %c0_3 = arith.constant 0 : index
    %c0_4 = arith.constant 0 : index
    %c0_5 = arith.constant 0 : index
    %4 = vector.load %arg3[%c0_3, %c0_4, %c0_5] : memref<1x9x32xf32, #tpu.memory_space<vmem>>, vector<1x9x32xf32>
    "tpu.trace_start"() <{level = 10 : i32, message = "bkt,btd->bkd"}> : () -> ()
    %cst = arith.constant dense<0.000000e+00> : vector<1x8x32xf32>
    %5 = tpu.matmul %3, %4, %cst {dimension_numbers = #tpu.dot_dimension_numbers<[2], [1], [1], [2], [0, 0, 0, 1, 1, 2], [0], [0]>} : vector<1x8x9xf32>, vector<1x9x32xf32>, vector<1x8x32xf32> -> vector<1x8x32xf32>
    "tpu.trace_stop"() : () -> ()
    %c0_6 = arith.constant 0 : index
    %c0_7 = arith.constant 0 : index
    %c0_8 = arith.constant 0 : index
    %6 = vector.load %arg4[%c0_6, %c0_7, %c0_8] : memref<1x8x32xf32, #tpu.memory_space<vmem>>, vector<1x8x32xf32>
    tpu.vector_store %arg4[%c0_6, %c0_7, %c0_8], %5 {strides = array<i32>} : memref<1x8x32xf32, #tpu.memory_space<vmem>>, vector<1x8x32xf32>,
    return
  }
  func.func @transform_0(%arg0: i32, %arg1: i32) -> (i32, i32, i32) {
    %c0_i32 = arith.constant 0 : i32
    %c0_i32_0 = arith.constant 0 : i32
    %c0_i32_1 = arith.constant 0 : i32
    return %arg0, %c0_i32, %c0_i32_0 : i32, i32, i32
  }
  func.func @transform_1(%arg0: i32, %arg1: i32) -> (i32, i32, i32) {
    %c0_i32 = arith.constant 0 : i32
    %c0_i32_0 = arith.constant 0 : i32
    return %arg0, %c0_i32, %arg1 : i32, i32, i32
  }
  func.func @transform_2(%arg0: i32, %arg1: i32) -> (i32, i32, i32) {
    %c0_i32 = arith.constant 0 : i32
    %c0_i32_0 = arith.constant 0 : i32
    return %arg0, %c0_i32, %arg1 : i32, i32, i32
  }
  func.func @transform_3(%arg0: i32, %arg1: i32) -> (i32, i32, i32) {
    %c0_i32 = arith.constant 0 : i32
    %c0_i32_0 = arith.constant 0 : i32
    %c0_i32_1 = arith.constant 0 : i32
    return %arg0, %c0_i32, %c0_i32_0 : i32, i32, i32
  }
}

</mosaic_0001>

<llo_original>
// kernel: tpu_custom_call.1
$region0: #{tpu_custom_call.1}
  #allocation0 [shape = 'u32[]', space=smem, size = 0x4, offset = 0x4, fixed_abs, tag = 'smem constant byte address 0x4 - core index']
  #allocation1 [shape = 'u32[144,128]{1,0:T(1,128)}', space=vmem, size = 0x12000, scoped, tag = 'internal scratch']
  #allocation2 [shape = 'f32[1,8,9]{2,1,0:T(8,128)}', space=vmem, size = 0x1000, scoped, tag = 'scratch operand']
  %s0 = inlined_call_operand.vmem [shape: f32[2,1,9], index: 0, kind: input, shape index: {}]
  %s1 = inlined_call_operand.vmem [shape: f32[2,9,32], index: 1, kind: input, shape index: {}]
  %s2 = inlined_call_operand.hbm [shape: f32[2,8,32], index: 2, kind: output, shape index: {0}]
  %s3 = inlined_call_operand.hbm [shape: s32[2,1,4], index: 3, kind: output, shape index: {1}]
  %4 = xla_tuple %s2, %s3
  %s5 = sld [smem:[#allocation0]]
  $region53: #{tpu_custom_call.1} parent=0
    _
  %s7 = ssub.s32 1, %s5
  %s8 = scalar_select 0, %s7, %s5
  $region1: #{tpu_custom_call.1} parent=0
    #allocation3 [shape = 'u8[8192]{0}', space=vmem, size = 0x2000, scoped, tag = 'output window, operand 0']
    #allocation4 [shape = 's32[2]{0}', space=sflag, size = 0x8, scoped, tag = 'scoped memory for tpu_custom_call.1']
    #allocation5 [shape = 'u8[1024]{0}', space=vmem, size = 0x400, scoped, tag = 'output window, operand 1']
    #allocation6 [shape = 's32[2]{0}', space=sflag, size = 0x8, scoped, tag = 'scoped memory for tpu_custom_call.1']
    %9 = vsyncpa [#allocation4], 0
    %s10 = scalar_lea.sflag [#allocation4], 1
    %11 = vsyncpa %s10, 0
    %12 = vsyncpa [#allocation6], 0
    %s13 = scalar_lea.sflag [#allocation6], 1
    %14 = vsyncpa %s13, 0
    loop: start=0, step=1, limit=4
    $region2: #{tpu_custom_call.1} parent=1 // loop_pre_header
      _
    $region3: #{tpu_custom_call.1} parent=1 // loop_header
      %s16 = sphi 0, %s20
      %p17 = scmp.ge.s32.totalorder %s16, 4
      %s23 = sphi 0, %s35
      %s24 = sphi 0, %s31
      %s25 = sphi 0, %s23
      %s26 = sphi 0, %s24
      %s27 = sphi 0, %s25
      %s28 = sphi 0, %s26
      %s38 = sphi 0, %s40
      %s41 = sphi 0, %s38
      %s42 = sphi 0, %s41
      %s58 = sphi 0, %s42
      %s66 = sphi 0, %s68
      %s69 = sphi 0, %s66
      %s70 = sphi 0, %s69
      %s86 = sphi 0, %s70
      %s94 = sphi 0, %s96
      %s97 = sphi 0, %s94
      %s98 = sphi 0, %s97
      %s114 = sphi 0, %s98
      %s120 = sphi 0, %s122
      %s123 = sphi 0, %s120
      %s124 = sphi 0, %s123
      %s140 = sphi 0, %s124
    $region4: #{tpu_custom_call.1} parent=1 // loop_header_branch
      %19 = sbr.rel (%p17) target = $region8
    $region5: #{tpu_custom_call.1} parent=1 // loop_body
      %s21 = ssub.s32 %s16, 1
      %s22 = ssub.s32 %s16, 2
      %s29 = sadd.s32 1, %s24
      %p30 = scmp.ge.s32.totalorder %s29, 1
      %s31 = scalar_select %p30, 0, %s29
      %s32 = sadd.s32 1, %s23
      %s33 = scalar_select %p30, %s32, %s23
      %p34 = scmp.ge.s32.totalorder %s33, 2
      %s35 = scalar_select %p34, 0, %s33
      %s36 = ssub.s32 %s23, %s35
      %p37 = scmp.eq.s32.totalorder %s36, 0
      %s39 = sadd.s32 %s38, 1
      %s40 = scalar_select %p37, %s38, %s39
      %p43 = pneg %p37
      %p44 = scmp.eq.s32.totalorder %s16, 1
      %p45 = por %p43, %p44
      %p46 = scmp.ne.s32.totalorder %s38, %s41
      %p47 = scmp.eq.s32.totalorder %s16, 0
      %p48 = por %p46, %p47
      %p49 = scmp.ne.s32.totalorder %s38, %s41
      %p50 = scmp.eq.s32.totalorder %s21, 1
      %p51 = por %p49, %p50
      %p52 = scmp.ne.s32.totalorder %s41, %s42
      %p53 = scmp.eq.s32.totalorder %s21, 0
      %p54 = por %p52, %p53
      %p55 = scmp.ne.s32.totalorder %s41, %s42
      %p56 = scmp.eq.s32.totalorder %s22, 1
      %p57 = por %p55, %p56
      %p59 = scmp.ne.s32.totalorder %s42, %s58
      %p60 = scmp.eq.s32.totalorder %s22, 0
      %p61 = por %p59, %p60
      %s62 = ssub.s32 %s23, %s35
      %s63 = ssub.s32 %s24, %s31
      %s64 = sor.u32 %s62, %s63
      %p65 = scmp.eq.s32.totalorder %s64, 0
      %s67 = sadd.s32 %s66, 1
      %s68 = scalar_select %p65, %s66, %s67
      %p71 = pneg %p65
      %p72 = scmp.eq.s32.totalorder %s16, 1
      %p73 = por %p71, %p72
      %p74 = scmp.ne.s32.totalorder %s66, %s69
      %p75 = scmp.eq.s32.totalorder %s16, 0
      %p76 = por %p74, %p75
      %p77 = scmp.ne.s32.totalorder %s66, %s69
      %p78 = scmp.eq.s32.totalorder %s21, 1
      %p79 = por %p77, %p78
      %p80 = scmp.ne.s32.totalorder %s69, %s70
      %p81 = scmp.eq.s32.totalorder %s21, 0
      %p82 = por %p80, %p81
      %p83 = scmp.ne.s32.totalorder %s69, %s70
      %p84 = scmp.eq.s32.totalorder %s22, 1
      %p85 = por %p83, %p84
      %p87 = scmp.ne.s32.totalorder %s70, %s86
      %p88 = scmp.eq.s32.totalorder %s22, 0
      %p89 = por %p87, %p88
      %s90 = ssub.s32 %s23, %s35
      %s91 = ssub.s32 %s24, %s31
      %s92 = sor.u32 %s90, %s91
      %p93 = scmp.eq.s32.totalorder %s92, 0
      %s95 = sadd.s32 %s94, 1
      %s96 = scalar_select %p93, %s94, %s95
      %p99 = pneg %p93
      %p100 = scmp.eq.s32.totalorder %s16, 1
      %p101 = por %p99, %p100
      %p102 = scmp.ne.s32.totalorder %s94, %s97
      %p103 = scmp.eq.s32.totalorder %s16, 0
      %p104 = por %p102, %p103
      %p105 = scmp.ne.s32.totalorder %s94, %s97
      %p106 = scmp.eq.s32.totalorder %s21, 1
      %p107 = por %p105, %p106
      %p108 = scmp.ne.s32.totalorder %s97, %s98
      %p109 = scmp.eq.s32.totalorder %s21, 0
      %p110 = por %p108, %p109
      %p111 = scmp.ne.s32.totalorder %s97, %s98
      %p112 = scmp.eq.s32.totalorder %s22, 1
      %p113 = por %p111, %p112
      %p115 = scmp.ne.s32.totalorder %s98, %s114
      %p116 = scmp.eq.s32.totalorder %s22, 0
      %p117 = por %p115, %p116
      %s118 = ssub.s32 %s23, %s35
      %p119 = scmp.eq.s32.totalorder %s118, 0
      %s121 = sadd.s32 %s120, 1
      %s122 = scalar_select %p119, %s120, %s121
      %p125 = pneg %p119
      %p126 = scmp.eq.s32.totalorder %s16, 1
      %p127 = por %p125, %p126
      %p128 = scmp.ne.s32.totalorder %s120, %s123
      %p129 = scmp.eq.s32.totalorder %s16, 0
      %p130 = por %p128, %p129
      %p131 = scmp.ne.s32.totalorder %s120, %s123
      %p132 = scmp.eq.s32.totalorder %s21, 1
      %p133 = por %p131, %p132
      %p134 = scmp.ne.s32.totalorder %s123, %s124
      %p135 = scmp.eq.s32.totalorder %s21, 0
      %p136 = por %p134, %p135
      %p137 = scmp.ne.s32.totalorder %s123, %s124
      %p138 = scmp.eq.s32.totalorder %s22, 1
      %p139 = por %p137, %p138
      %p141 = scmp.ne.s32.totalorder %s124, %s140
      %p142 = scmp.eq.s32.totalorder %s22, 0
      %p143 = por %p141, %p142
      %p144 = scmp.le.s32.totalorder 1, %s16
      %p145 = scmp.lt.s32.totalorder %s16, 3
      %p146 = pnand %p144, %p145
      %p147 = pneg %p146
      // Predicated region
      $region9: #{tpu_custom_call.1} parent=5 // pred_check
        _
      $region10: #{tpu_custom_call.1} parent=5 // pred_check_branch
        %149 = sbr.rel (%p146) target = $region12
      $region11: #{tpu_custom_call.1} parent=5 // pred_region
        %s150 = ssub.s32 %s16, 1
      $region12: #{tpu_custom_call.1} parent=5 // pred_fallthru
        _
      %p151 = scmp.lt.s32.totalorder %s16, 2
      // Predicated region
      $region13: #{tpu_custom_call.1} parent=5 // pred_check
        %p152 = pneg %p151
      $region14: #{tpu_custom_call.1} parent=5 // pred_check_branch
        %154 = sbr.rel (%p152) target = $region16
      $region15: #{tpu_custom_call.1} parent=5 // pred_region
        // Predicated region
        $region17: #{tpu_custom_call.1} parent=15 // pred_check
          %p155 = pneg %p48
        $region18: #{tpu_custom_call.1} parent=15 // pred_check_branch
          %157 = sbr.rel (%p155) target = $region20
        $region19: #{tpu_custom_call.1} parent=15 // pred_region
          %p158 = scmp.lt.s32.totalorder %s23, 1
          %s159 = scalar_select %p158, %s23, 1
          %s160 = scalar_lea.vmem %s0, %s159
        $region20: #{tpu_custom_call.1} parent=15 // pred_fallthru
          _
        // Predicated region
        $region21: #{tpu_custom_call.1} parent=15 // pred_check
          %p161 = pneg %p76
        $region22: #{tpu_custom_call.1} parent=15 // pred_check_branch
          %163 = sbr.rel (%p161) target = $region24
        $region23: #{tpu_custom_call.1} parent=15 // pred_region
          %p164 = scmp.lt.s32.totalorder %s23, 1
          %s165 = scalar_select %p164, %s23, 1
          %p166 = scmp.lt.s32.totalorder %s24, 0
          %s167 = scalar_select %p166, %s24, 0
          %s168 = smul.addr %s165, 2
          %s169 = sadd.s32 %s167, %s168
          %s170 = smul.addr %s169, 8
          %s171 = scalar_lea.vmem %s1, %s170
        $region24: #{tpu_custom_call.1} parent=15 // pred_fallthru
          _
      $region16: #{tpu_custom_call.1} parent=5 // pred_fallthru
        _
      %p172 = scmp.le.s32.totalorder 1, %s16
      %p173 = scmp.lt.s32.totalorder %s16, 3
      %p174 = pnand %p172, %p173
      %p175 = pneg %p174
      // Predicated region
      $region25: #{tpu_custom_call.1} parent=5 // pred_check
        _
      $region26: #{tpu_custom_call.1} parent=5 // pred_check_branch
        %177 = sbr.rel (%p174) target = $region28
      $region27: #{tpu_custom_call.1} parent=5 // pred_region
        %s178 = ssub.s32 %s16, 1
        %p179 = scmp.lt.s32.totalorder %s25, 1
        %s180 = scalar_select %p179, %s25, 1
        %s181 = scalar_lea.vmem %s0, %s180
        %p182 = pneg %p54
        %p183 = pneg %p51
        %p184 = scmp.lt.s32.totalorder %s25, 1
        %s185 = scalar_select %p184, %s25, 1
        %p186 = scmp.lt.s32.totalorder %s26, 0
        %s187 = scalar_select %p186, %s26, 0
        %s188 = smul.addr %s185, 2
        %s189 = sadd.s32 %s187, %s188
        %s190 = smul.addr %s189, 8
        %s191 = scalar_lea.vmem %s1, %s190
        %p192 = pneg %p82
        %p193 = pneg %p79
        %p194 = pneg %p110
        %p195 = pneg %p107
        %s196 = sand.u32 %s97, 1
        %s197 = scalar_lea.sflag [#allocation4], %s196
        %s198 = sand.u32 %s97, 1
        %s199 = smul.addr %s198, 8
        %s200 = scalar_lea.vmem [#allocation3], %s199
        %p201 = pneg %p136
        %p202 = pneg %p133
        %s203 = sand.u32 %s123, 1
        %s204 = scalar_lea.sflag [#allocation6], %s203
        %s205 = sand.u32 %s123, 1
        %s206 = scalar_lea.vmem [#allocation5], %s205
        %p207 = scmp.lt.s32.totalorder %s25, 1
        %s208 = scalar_select %p207, %s25, 1
        %s209 = scalar_lea.vmem %s0, %s208
        %p210 = scmp.lt.s32.totalorder %s25, 1
        %s211 = scalar_select %p210, %s25, 1
        %p212 = scmp.lt.s32.totalorder %s26, 0
        %s213 = scalar_select %p212, %s26, 0
        %s214 = smul.addr %s211, 2
        %s215 = sadd.s32 %s213, %s214
        %s216 = smul.addr %s215, 8
        %s217 = scalar_lea.vmem %s1, %s216
        %p218 = scmp.eq.s32.totalorder %s26, 0
        // Predicated region
        $region29: #{tpu_custom_call.1} parent=27 // pred_check
          %p219 = pneg %p218
        $region30: #{tpu_custom_call.1} parent=27 // pred_check_branch
          %221 = sbr.rel (%p219) target = $region32
        $region31: #{tpu_custom_call.1} parent=27 // pred_region
          %v222 = vld [vmem:[%s209] sm:$0x1]
          %v223 = vlaneseq
          %v224 = vshrl.u32 %v223, 7
          %v225 = vsub.s32 0, %v224
          %v226 = vrot.slane %v222, %v225
          %228 = vbcast.lane.b32.xlu0 %v226, 256
          %v229 = vpop.permute.xlu0 %228
          %s231 = sor.u32 256, 8
          %232 = vbcast.lane.b32.xlu0 %v226, %s231
          %v233 = vpop.permute.xlu0 %232
          %v234 = vlaneseq
          %v235 = vshrl.u32 %v234, 7
          %v236 = vadd.s32 %v235, 8
          %v237 = vlaneseq
          %v238 = vand.u32 %v237, 127
          %v240 = vlaneseq
          %v241 = vshrl.u32 %v240, 7
          %v242 = vsub.s32 0, %v241
          %v243 = vrot.slane %v222, %v242
          %vm245 = vcmp.gt.f32.partialorder %v243, %v229
          %vm246 = vcmp.gt.f32.partialorder %v243, %v233
          %vm247 = vcmp.eq.f32.partialorder %v243, %v229
          %vm248 = vcmp.eq.f32.partialorder %v243, %v233
          %vm249 = vcmp.lt.s32.totalorder %v238, %v235
          %vm250 = vcmp.lt.s32.totalorder %v238, %v236
          %vm251 = vmand %vm247, %vm249
          %vm252 = vmand %vm248, %vm250
          %vm253 = vmor %vm245, %vm251
          %vm254 = vmor %vm246, %vm252
          %v255 = vsel %vm253, 1, 0
          %v256 = vsel %vm254, 1, 0
          %vm257 = vcmask 72704
          %v258 = vsel %vm257, %v255, 0
          %v259 = vand.u32 %v258, 65535
          %v260 = vshrl.u32 %v258, 16
          %v261 = vcvt.s32.f32 %v259
          %v262 = vcvt.s32.f32 %v260
          %263 = vadd.xlane.f32.xlu0 %v261
          %v264 = vpop.xlane.xlu0 %263
          %265 = vadd.xlane.f32.xlu0 %v262
          %v266 = vpop.xlane.xlu0 %265
          %v267 = vcvt.f32.s32 %v264
          %v268 = vcvt.f32.s32 %v266
          %v269 = vshll.u32 %v268, 16
          %v270 = vadd.s32 %v269, %v267
          %vm271 = vcmask 65536
          %v272 = vsel %vm271, %v256, 0
          %v273 = vand.u32 %v272, 65535
          %v274 = vshrl.u32 %v272, 16
          %v275 = vcvt.s32.f32 %v273
          %v276 = vcvt.s32.f32 %v274
          %277 = vadd.xlane.f32.xlu0 %v275
          %v278 = vpop.xlane.xlu0 %277
          %279 = vadd.xlane.f32.xlu0 %v276
          %v280 = vpop.xlane.xlu0 %279
          %v281 = vcvt.f32.s32 %v278
          %v282 = vcvt.f32.s32 %v280
          %v283 = vshll.u32 %v282, 16
          %v284 = vadd.s32 %v283, %v281
          %vm285 = vcmp.lt.s32.totalorder %v270, 5
          %vm286 = vcmp.lt.s32.totalorder %v284, 5
          %vm287 = vcmp.lt.s32.totalorder %v235, %v238
          %vm288 = vcmp.lt.s32.totalorder %v236, %v238
          %v289 = vsel %vm287, 1, 0
          %v290 = vsel %vm288, 1, 0
          %v291 = vcvt.s32.f32 %v289
          %v292 = vcvt.s32.f32 %v290
          %v293 = vsel %vm285, 1, 0
          %v294 = vsel %vm286, 1, 0
          %v295 = vcvt.s32.f32 %v293
          %v296 = vcvt.s32.f32 %v294
          %v299 = vlaneseq
          %v300 = vshrl.u32 %v299, 7
          %v301 = vsub.s32 %v238, %v300
          %v302 = vrot.slane %v295, %v301
          %v303 = vadd.s32 %v238, 4294967288
          %v304 = vlaneseq
          %v305 = vshrl.u32 %v304, 7
          %v306 = vsub.s32 %v303, %v305
          %v307 = vrot.slane %v296, %v306
          %vm308 = vcmask 130112
          %v309 = vsel %vm308, %v307, %v302
          %v310 = vsel %vm257, %v309, 0
          %vm312 = vcmask 1040384
          %v314 = vsel %vm312, %v292, 0
          %316 = vmatprep.subr.mxu0 0.0
          %317 = vmatpush1.msra.mxu0 %v291
          %318 = vmatprep.subr.mxu0 0.0
          %319 = vmatpush1.msra.mxu0 %v314
          %320 = vmatprep.subr.mxu0 0.0
          %321 = vmatpush1.msra.mxu0 0.0
          %322 = vmatprep.subr.mxu0 0.0
          %323 = vmatpush1.msra.mxu0 0.0
          %324 = vmatprep.subr.mxu0 0.0
          %325 = vmatpush1.msra.mxu0 0.0
          %326 = vmatprep.subr.mxu0 0.0
          %327 = vmatpush1.msra.mxu0 0.0
          %328 = vmatprep.subr.mxu0 0.0
          %329 = vmatpush1.msra.mxu0 0.0
          %330 = vmatprep.subr.mxu0 0.0
          %331 = vmatpush1.msra.mxu0 0.0
          %332 = vmatprep.subr.mxu0 0.0
          %333 = vmatpush1.msra.mxu0 0.0
          %334 = vmatprep.subr.mxu0 0.0
          %335 = vmatpush1.msra.mxu0 0.0
          %336 = vmatprep.subr.mxu0 0.0
          %337 = vmatpush1.msra.mxu0 0.0
          %338 = vmatprep.subr.mxu0 0.0
          %339 = vmatpush1.msra.mxu0 0.0
          %340 = vmatprep.subr.mxu0 0.0
          %341 = vmatpush1.msra.mxu0 0.0
          %342 = vmatprep.subr.mxu0 0.0
          %343 = vmatpush1.msra.mxu0 0.0
          %344 = vmatprep.subr.mxu0 0.0
          %345 = vmatpush1.msra.mxu0 0.0
          %346 = vmatprep.subr.mxu0 0.0
          %347 = vmatpush1.msra.mxu0 0.0
          %348 = vmatprep.subr.mxu0 0.0
          %349 = vmatpush1.msra.mxu0 0.0
          %350 = vmatprep.subr.mxu0 0.0
          %351 = vmatpush1.msra.mxu0 0.0
          %352 = vmatprep.subr.mxu0 0.0
          %353 = vmatpush1.msra.mxu0 0.0
          %354 = vmatprep.subr.mxu0 0.0
          %355 = vmatpush1.msra.mxu0 0.0
          %356 = vmatprep.subr.mxu0 0.0
          %357 = vmatpush1.msra.mxu0 0.0
          %358 = vmatprep.subr.mxu0 0.0
          %359 = vmatpush1.msra.mxu0 0.0
          %360 = vmatprep.subr.mxu0 0.0
          %361 = vmatpush1.msra.mxu0 0.0
          %362 = vmatprep.subr.mxu0 0.0
          %363 = vmatpush1.msra.mxu0 0.0
          %364 = vmatprep.subr.mxu0 0.0
          %365 = vmatpush1.msra.mxu0 0.0
          %366 = vmatprep.subr.mxu0 0.0
          %367 = vmatpush1.msra.mxu0 0.0
          %368 = vmatprep.subr.mxu0 0.0
          %369 = vmatpush1.msra.mxu0 0.0
          %370 = vmatprep.subr.mxu0 0.0
          %371 = vmatpush1.msra.mxu0 0.0
          %372 = vmatprep.subr.mxu0 0.0
          %373 = vmatpush1.msra.mxu0 0.0
          %374 = vmatprep.subr.mxu0 0.0
          %375 = vmatpush1.msra.mxu0 0.0
          %376 = vmatprep.subr.mxu0 0.0
          %377 = vmatpush1.msra.mxu0 0.0
          %378 = vmatprep.subr.mxu0 0.0
          %379 = vmatpush1.msra.mxu0 0.0
          %380 = vmatprep.mubr.f32.mxu0 0.0
          %381 = vmatmul.mubr.f32.gmra.mrb[0].mxu0 %v310
          %v382 = vpop.f32.mrb[0].mxu0
          %v383 = vadd.f32 0.0, %v382
          %v384 = vpop.f32.mrb[0].mxu0
          %385 = vdwg.mxu0
          %v386 = vcvt.f32.s32.to.zero.pseudo %v383
          %v387 = vlaneseq
          %v388 = vshrl.u32 %v387, 7
          %v389 = vsub.s32 0, %v388
          %v390 = vrot.slane %v386, %v389
          %vm391 = vcmp.eq.s32.totalorder %v390, %v235
          %vm392 = vcmp.eq.s32.totalorder %v293, 1
          %vm393 = vcmp.eq.s32.totalorder %v294, 1
          %v394 = vsel %vm391, 1, 0
          %v395 = vlaneseq
          %v396 = vshrl.u32 %v395, 7
          %v397 = vsub.s32 0, %v396
          %v398 = vrot.slane %v394, %v397
          %400 = vbcast.lane.b32.xlu0 %v398, 256
          %v401 = vpop.permute.xlu0 %400
          %s403 = sor.u32 256, 8
          %404 = vbcast.lane.b32.xlu0 %v398, %s403
          %v405 = vpop.permute.xlu0 %404
          %v406 = vlaneseq
          %v407 = vshrl.u32 %v406, 7
          %v408 = vsub.s32 1, %v407
          %v409 = vrot.slane %v394, %v408
          %411 = vbcast.lane.b32.xlu0 %v409, 256
          %v412 = vpop.permute.xlu0 %411
          %s414 = sor.u32 256, 8
          %415 = vbcast.lane.b32.xlu0 %v409, %s414
          %v416 = vpop.permute.xlu0 %415
          %v417 = vlaneseq
          %v418 = vshrl.u32 %v417, 7
          %v419 = vsub.s32 2, %v418
          %v420 = vrot.slane %v394, %v419
          %422 = vbcast.lane.b32.xlu0 %v420, 256
          %v423 = vpop.permute.xlu0 %422
          %s425 = sor.u32 256, 8
          %426 = vbcast.lane.b32.xlu0 %v420, %s425
          %v427 = vpop.permute.xlu0 %426
          %v428 = vlaneseq
          %v429 = vshrl.u32 %v428, 7
          %v430 = vsub.s32 3, %v429
          %v431 = vrot.slane %v394, %v430
          %433 = vbcast.lane.b32.xlu0 %v431, 256
          %v434 = vpop.permute.xlu0 %433
          %s436 = sor.u32 256, 8
          %437 = vbcast.lane.b32.xlu0 %v431, %s436
          %v438 = vpop.permute.xlu0 %437
          %v439 = vlaneseq
          %v440 = vshrl.u32 %v439, 7
          %v441 = vsub.s32 4, %v440
          %v442 = vrot.slane %v394, %v441
          %444 = vbcast.lane.b32.xlu0 %v442, 256
          %v445 = vpop.permute.xlu0 %444
          %s447 = sor.u32 256, 8
          %448 = vbcast.lane.b32.xlu0 %v442, %s447
          %v449 = vpop.permute.xlu0 %448
          %v450 = vlaneseq
          %v451 = vshrl.u32 %v450, 7
          %v452 = vsub.s32 5, %v451
          %v453 = vrot.slane %v394, %v452
          %455 = vbcast.lane.b32.xlu0 %v453, 256
          %v456 = vpop.permute.xlu0 %455
          %s458 = sor.u32 256, 8
          %459 = vbcast.lane.b32.xlu0 %v453, %s458
          %v460 = vpop.permute.xlu0 %459
          %v461 = vlaneseq
          %v462 = vshrl.u32 %v461, 7
          %v463 = vsub.s32 6, %v462
          %v464 = vrot.slane %v394, %v463
          %466 = vbcast.lane.b32.xlu0 %v464, 256
          %v467 = vpop.permute.xlu0 %466
          %s469 = sor.u32 256, 8
          %470 = vbcast.lane.b32.xlu0 %v464, %s469
          %v471 = vpop.permute.xlu0 %470
          %v472 = vlaneseq
          %v473 = vshrl.u32 %v472, 7
          %v474 = vsub.s32 7, %v473
          %v475 = vrot.slane %v394, %v474
          %477 = vbcast.lane.b32.xlu0 %v475, 256
          %v478 = vpop.permute.xlu0 %477
          %s480 = sor.u32 256, 8
          %481 = vbcast.lane.b32.xlu0 %v475, %s480
          %v482 = vpop.permute.xlu0 %481
          %vm483 = vcmp.ne.s32.totalorder %v401, 0
          %vm484 = vcmp.ne.s32.totalorder %v405, 0
          %vm485 = vcmp.ne.s32.totalorder %v412, 0
          %vm486 = vcmp.ne.s32.totalorder %v416, 0
          %vm487 = vcmp.ne.s32.totalorder %v423, 0
          %vm488 = vcmp.ne.s32.totalorder %v427, 0
          %vm489 = vcmp.ne.s32.totalorder %v434, 0
          %vm490 = vcmp.ne.s32.totalorder %v438, 0
          %vm491 = vcmp.ne.s32.totalorder %v445, 0
          %vm492 = vcmp.ne.s32.totalorder %v449, 0
          %vm493 = vcmp.ne.s32.totalorder %v456, 0
          %vm494 = vcmp.ne.s32.totalorder %v460, 0
          %vm495 = vcmp.ne.s32.totalorder %v467, 0
          %vm496 = vcmp.ne.s32.totalorder %v471, 0
          %vm497 = vcmp.ne.s32.totalorder %v478, 0
          %vm498 = vcmp.ne.s32.totalorder %v482, 0
          %vm499 = vmand %vm392, %vm483
          %vm500 = vmand %vm393, %vm484
          %vm501 = vmand %vm392, %vm485
          %vm502 = vmand %vm393, %vm486
          %vm503 = vmand %vm392, %vm487
          %vm504 = vmand %vm393, %vm488
          %vm505 = vmand %vm392, %vm489
          %vm506 = vmand %vm393, %vm490
          %vm507 = vmand %vm392, %vm491
          %vm508 = vmand %vm393, %vm492
          %vm509 = vmand %vm392, %vm493
          %vm510 = vmand %vm393, %vm494
          %vm511 = vmand %vm392, %vm495
          %vm512 = vmand %vm393, %vm496
          %vm513 = vmand %vm392, %vm497
          %vm514 = vmand %vm393, %vm498
          %516 = vbcast.lane.b32.xlu0 %v238, 256
          %v517 = vpop.permute.xlu0 %516
          %s519 = sor.u32 256, 8
          %520 = vbcast.lane.b32.xlu0 %v238, %s519
          %v521 = vpop.permute.xlu0 %520
          %v522 = vsel %vm499, %v517, 0
          %v523 = vsel %vm500, %v521, 0
          %v524 = vsel %vm501, %v517, 0
          %v525 = vsel %vm502, %v521, 0
          %v526 = vsel %vm503, %v517, 0
          %v527 = vsel %vm504, %v521, 0
          %v528 = vsel %vm505, %v517, 0
          %v529 = vsel %vm506, %v521, 0
          %v530 = vsel %vm507, %v517, 0
          %v531 = vsel %vm508, %v521, 0
          %v532 = vsel %vm509, %v517, 0
          %v533 = vsel %vm510, %v521, 0
          %v534 = vsel %vm511, %v517, 0
          %v535 = vsel %vm512, %v521, 0
          %v536 = vsel %vm513, %v517, 0
          %v537 = vsel %vm514, %v521, 0
          %538 = vset.pattern.permute.xlu0 0
          %539 = vperm.xlu0 %538, %v522
          %v540 = vpop.permute.xlu0 %539
          %541 = vset.pattern.permute.xlu0 0
          %542 = vperm.xlu0 %541, %v523
          %v543 = vpop.permute.xlu0 %542
          %544 = vset.pattern.permute.xlu0 0
          %545 = vperm.xlu0 %544, %v524
          %v546 = vpop.permute.xlu0 %545
          %547 = vset.pattern.permute.xlu0 0
          %548 = vperm.xlu0 %547, %v525
          %v549 = vpop.permute.xlu0 %548
          %550 = vset.pattern.permute.xlu0 0
          %551 = vperm.xlu0 %550, %v526
          %v552 = vpop.permute.xlu0 %551
          %553 = vset.pattern.permute.xlu0 0
          %554 = vperm.xlu0 %553, %v527
          %v555 = vpop.permute.xlu0 %554
          %556 = vset.pattern.permute.xlu0 0
          %557 = vperm.xlu0 %556, %v528
          %v558 = vpop.permute.xlu0 %557
          %559 = vset.pattern.permute.xlu0 0
          %560 = vperm.xlu0 %559, %v529
          %v561 = vpop.permute.xlu0 %560
          %562 = vset.pattern.permute.xlu0 0
          %563 = vperm.xlu0 %562, %v530
          %v564 = vpop.permute.xlu0 %563
          %565 = vset.pattern.permute.xlu0 0
          %566 = vperm.xlu0 %565, %v531
          %v567 = vpop.permute.xlu0 %566
          %568 = vset.pattern.permute.xlu0 0
          %569 = vperm.xlu0 %568, %v532
          %v570 = vpop.permute.xlu0 %569
          %571 = vset.pattern.permute.xlu0 0
          %572 = vperm.xlu0 %571, %v533
          %v573 = vpop.permute.xlu0 %572
          %574 = vset.pattern.permute.xlu0 0
          %575 = vperm.xlu0 %574, %v534
          %v576 = vpop.permute.xlu0 %575
          %577 = vset.pattern.permute.xlu0 0
          %578 = vperm.xlu0 %577, %v535
          %v579 = vpop.permute.xlu0 %578
          %580 = vset.pattern.permute.xlu0 0
          %581 = vperm.xlu0 %580, %v536
          %v582 = vpop.permute.xlu0 %581
          %583 = vset.pattern.permute.xlu0 0
          %584 = vperm.xlu0 %583, %v537
          %v585 = vpop.permute.xlu0 %584
          %v586 = vlaneseq
          %v587 = vshrl.u32 %v586, 7
          %v588 = vsub.s32 %v238, %v587
          %v589 = vrot.slane %v540, %v588
          %v590 = vlaneseq
          %v591 = vshrl.u32 %v590, 7
          %v592 = vsub.s32 %v303, %v591
          %v593 = vrot.slane %v543, %v592
          %v594 = vsel %vm308, %v593, %v589
          %v595 = vlaneseq
          %v596 = vshrl.u32 %v595, 7
          %v597 = vsub.s32 %v238, %v596
          %v598 = vrot.slane %v546, %v597
          %v599 = vlaneseq
          %v600 = vshrl.u32 %v599, 7
          %v601 = vsub.s32 %v303, %v600
          %v602 = vrot.slane %v549, %v601
          %v603 = vsel %vm308, %v602, %v598
          %v604 = vlaneseq
          %v605 = vshrl.u32 %v604, 7
          %v606 = vsub.s32 %v238, %v605
          %v607 = vrot.slane %v552, %v606
          %v608 = vlaneseq
          %v609 = vshrl.u32 %v608, 7
          %v610 = vsub.s32 %v303, %v609
          %v611 = vrot.slane %v555, %v610
          %v612 = vsel %vm308, %v611, %v607
          %v613 = vlaneseq
          %v614 = vshrl.u32 %v613, 7
          %v615 = vsub.s32 %v238, %v614
          %v616 = vrot.slane %v558, %v615
          %v617 = vlaneseq
          %v618 = vshrl.u32 %v617, 7
          %v619 = vsub.s32 %v303, %v618
          %v620 = vrot.slane %v561, %v619
          %v621 = vsel %vm308, %v620, %v616
          %v622 = vlaneseq
          %v623 = vshrl.u32 %v622, 7
          %v624 = vsub.s32 %v238, %v623
          %v625 = vrot.slane %v564, %v624
          %v626 = vlaneseq
          %v627 = vshrl.u32 %v626, 7
          %v628 = vsub.s32 %v303, %v627
          %v629 = vrot.slane %v567, %v628
          %v630 = vsel %vm308, %v629, %v625
          %v631 = vlaneseq
          %v632 = vshrl.u32 %v631, 7
          %v633 = vsub.s32 %v238, %v632
          %v634 = vrot.slane %v570, %v633
          %v635 = vlaneseq
          %v636 = vshrl.u32 %v635, 7
          %v637 = vsub.s32 %v303, %v636
          %v638 = vrot.slane %v573, %v637
          %v639 = vsel %vm308, %v638, %v634
          %v640 = vlaneseq
          %v641 = vshrl.u32 %v640, 7
          %v642 = vsub.s32 %v238, %v641
          %v643 = vrot.slane %v576, %v642
          %v644 = vlaneseq
          %v645 = vshrl.u32 %v644, 7
          %v646 = vsub.s32 %v303, %v645
          %v647 = vrot.slane %v579, %v646
          %v648 = vsel %vm308, %v647, %v643
          %v649 = vlaneseq
          %v650 = vshrl.u32 %v649, 7
          %v651 = vsub.s32 %v238, %v650
          %v652 = vrot.slane %v582, %v651
          %v653 = vlaneseq
          %v654 = vshrl.u32 %v653, 7
          %v655 = vsub.s32 %v303, %v654
          %v656 = vrot.slane %v585, %v655
          %v657 = vsel %vm308, %v656, %v652
          %vm658 = vcmask 1041409
          %v659 = vsel %vm658, %v603, %v594
          %vm660 = vcmask 1042434
          %v661 = vsel %vm660, %v612, %v659
          %vm662 = vcmask 1043459
          %v663 = vsel %vm662, %v621, %v661
          %vm664 = vcmask 1044484
          %v665 = vsel %vm664, %v630, %v663
          %vm666 = vcmask 1045509
          %v667 = vsel %vm666, %v639, %v665
          %vm668 = vcmask 1046534
          %v669 = vsel %vm668, %v648, %v667
          %vm670 = vcmask 1047559
          %v671 = vsel %vm670, %v657, %v669
          %v672 = vsel %vm257, %v671, 0
          %v673 = vand.u32 %v672, 65535
          %v674 = vshrl.u32 %v672, 16
          %v675 = vcvt.s32.f32 %v673
          %v676 = vcvt.s32.f32 %v674
          %677 = vadd.xlane.f32.xlu0 %v675
          %v678 = vpop.xlane.xlu0 %677
          %679 = vadd.xlane.f32.xlu0 %v676
          %v680 = vpop.xlane.xlu0 %679
          %v681 = vcvt.f32.s32 %v678
          %v682 = vcvt.f32.s32 %v680
          %v683 = vshll.u32 %v682, 16
          %v684 = vadd.s32 %v683, %v681
          %v685 = vsub.s32 %v684, 1
          %v686 = vadd.s32 %v238, 1
          %v687 = vlaneseq
          %v688 = vshrl.u32 %v687, 7
          %v689 = vsub.s32 %v686, %v688
          %v690 = vrot.slane %v685, %v689
          %vm691 = vcmask 25601
          %692 = vst.msk [vmem:[%s206 - $0x1] sm:$0x2] %vm691, %v690
          %v693 = vsel %vm499, 1, 0
          %v694 = vsel %vm500, 1, 0
          %v695 = vsel %vm501, 1, 0
          %v696 = vsel %vm502, 1, 0
          %v697 = vsel %vm503, 1, 0
          %v698 = vsel %vm504, 1, 0
          %v699 = vsel %vm505, 1, 0
          %v700 = vsel %vm506, 1, 0
          %v701 = vsel %vm507, 1, 0
          %v702 = vsel %vm508, 1, 0
          %v703 = vsel %vm509, 1, 0
          %v704 = vsel %vm510, 1, 0
          %v705 = vsel %vm511, 1, 0
          %v706 = vsel %vm512, 1, 0
          %v707 = vsel %vm513, 1, 0
          %v708 = vsel %vm514, 1, 0
          %v709 = vcvt.s32.f32 %v693
          %v710 = vcvt.s32.f32 %v694
          %v711 = vcvt.s32.f32 %v695
          %v712 = vcvt.s32.f32 %v696
          %v713 = vcvt.s32.f32 %v697
          %v714 = vcvt.s32.f32 %v698
          %v715 = vcvt.s32.f32 %v699
          %v716 = vcvt.s32.f32 %v700
          %v717 = vcvt.s32.f32 %v701
          %v718 = vcvt.s32.f32 %v702
          %v719 = vcvt.s32.f32 %v703
          %v720 = vcvt.s32.f32 %v704
          %v721 = vcvt.s32.f32 %v705
          %v722 = vcvt.s32.f32 %v706
          %v723 = vcvt.s32.f32 %v707
          %v724 = vcvt.s32.f32 %v708
          %741 = vset.pattern.permute.xlu0 0
          %742 = vperm.xlu0 %741, %v709
          %v743 = vpop.permute.xlu0 %742
          %744 = vset.pattern.permute.xlu0 0
          %745 = vperm.xlu0 %744, %v710
          %v746 = vpop.permute.xlu0 %745
          %747 = vset.pattern.permute.xlu0 0
          %748 = vperm.xlu0 %747, %v711
          %v749 = vpop.permute.xlu0 %748
          %750 = vset.pattern.permute.xlu0 0
          %751 = vperm.xlu0 %750, %v712
          %v752 = vpop.permute.xlu0 %751
          %753 = vset.pattern.permute.xlu0 0
          %754 = vperm.xlu0 %753, %v713
          %v755 = vpop.permute.xlu0 %754
          %756 = vset.pattern.permute.xlu0 0
          %757 = vperm.xlu0 %756, %v714
          %v758 = vpop.permute.xlu0 %757
          %759 = vset.pattern.permute.xlu0 0
          %760 = vperm.xlu0 %759, %v715
          %v761 = vpop.permute.xlu0 %760
          %762 = vset.pattern.permute.xlu0 0
          %763 = vperm.xlu0 %762, %v716
          %v764 = vpop.permute.xlu0 %763
          %765 = vset.pattern.permute.xlu0 0
          %766 = vperm.xlu0 %765, %v717
          %v767 = vpop.permute.xlu0 %766
          %768 = vset.pattern.permute.xlu0 0
          %769 = vperm.xlu0 %768, %v718
          %v770 = vpop.permute.xlu0 %769
          %771 = vset.pattern.permute.xlu0 0
          %772 = vperm.xlu0 %771, %v719
          %v773 = vpop.permute.xlu0 %772
          %774 = vset.pattern.permute.xlu0 0
          %775 = vperm.xlu0 %774, %v720
          %v776 = vpop.permute.xlu0 %775
          %777 = vset.pattern.permute.xlu0 0
          %778 = vperm.xlu0 %777, %v721
          %v779 = vpop.permute.xlu0 %778
          %780 = vset.pattern.permute.xlu0 0
          %781 = vperm.xlu0 %780, %v722
          %v782 = vpop.permute.xlu0 %781
          %783 = vset.pattern.permute.xlu0 0
          %784 = vperm.xlu0 %783, %v723
          %v785 = vpop.permute.xlu0 %784
          %786 = vset.pattern.permute.xlu0 0
          %787 = vperm.xlu0 %786, %v724
          %v788 = vpop.permute.xlu0 %787
          %v789 = vlaneseq
          %v790 = vshrl.u32 %v789, 7
          %v791 = vsub.s32 %v238, %v790
          %v792 = vrot.slane %v743, %v791
          %v793 = vlaneseq
          %v794 = vshrl.u32 %v793, 7
          %v795 = vsub.s32 %v303, %v794
          %v796 = vrot.slane %v746, %v795
          %v797 = vsel %vm308, %v796, %v792
          %v798 = vlaneseq
          %v799 = vshrl.u32 %v798, 7
          %v800 = vsub.s32 %v238, %v799
          %v801 = vrot.slane %v749, %v800
          %v802 = vlaneseq
          %v803 = vshrl.u32 %v802, 7
          %v804 = vsub.s32 %v303, %v803
          %v805 = vrot.slane %v752, %v804
          %v806 = vsel %vm308, %v805, %v801
          %v807 = vlaneseq
          %v808 = vshrl.u32 %v807, 7
          %v809 = vsub.s32 %v238, %v808
          %v810 = vrot.slane %v755, %v809
          %v811 = vlaneseq
          %v812 = vshrl.u32 %v811, 7
          %v813 = vsub.s32 %v303, %v812
          %v814 = vrot.slane %v758, %v813
          %v815 = vsel %vm308, %v814, %v810
          %v816 = vlaneseq
          %v817 = vshrl.u32 %v816, 7
          %v818 = vsub.s32 %v238, %v817
          %v819 = vrot.slane %v761, %v818
          %v820 = vlaneseq
          %v821 = vshrl.u32 %v820, 7
          %v822 = vsub.s32 %v303, %v821
          %v823 = vrot.slane %v764, %v822
          %v824 = vsel %vm308, %v823, %v819
          %v825 = vlaneseq
          %v826 = vshrl.u32 %v825, 7
          %v827 = vsub.s32 %v238, %v826
          %v828 = vrot.slane %v767, %v827
          %v829 = vlaneseq
          %v830 = vshrl.u32 %v829, 7
          %v831 = vsub.s32 %v303, %v830
          %v832 = vrot.slane %v770, %v831
          %v833 = vsel %vm308, %v832, %v828
          %v834 = vlaneseq
          %v835 = vshrl.u32 %v834, 7
          %v836 = vsub.s32 %v238, %v835
          %v837 = vrot.slane %v773, %v836
          %v838 = vlaneseq
          %v839 = vshrl.u32 %v838, 7
          %v840 = vsub.s32 %v303, %v839
          %v841 = vrot.slane %v776, %v840
          %v842 = vsel %vm308, %v841, %v837
          %v843 = vlaneseq
          %v844 = vshrl.u32 %v843, 7
          %v845 = vsub.s32 %v238, %v844
          %v846 = vrot.slane %v779, %v845
          %v847 = vlaneseq
          %v848 = vshrl.u32 %v847, 7
          %v849 = vsub.s32 %v303, %v848
          %v850 = vrot.slane %v782, %v849
          %v851 = vsel %vm308, %v850, %v846
          %v852 = vlaneseq
          %v853 = vshrl.u32 %v852, 7
          %v854 = vsub.s32 %v238, %v853
          %v855 = vrot.slane %v785, %v854
          %v856 = vlaneseq
          %v857 = vshrl.u32 %v856, 7
          %v858 = vsub.s32 %v303, %v857
          %v859 = vrot.slane %v788, %v858
          %v860 = vsel %vm308, %v859, %v855
          %v861 = vsel %vm658, %v806, %v797
          %v862 = vsel %vm660, %v815, %v861
          %v863 = vsel %vm662, %v824, %v862
          %v864 = vsel %vm664, %v833, %v863
          %v865 = vsel %vm666, %v842, %v864
          %v866 = vsel %vm668, %v851, %v865
          %v867 = vsel %vm670, %v860, %v866
          %869 = vst.msk [vmem:[#allocation2] sm:$0xff] %vm257, %v867
        $region32: #{tpu_custom_call.1} parent=27 // pred_fallthru
          _
        %v870 = vld [vmem:[#allocation2] sm:$0xff]
        %v871 = vld [vmem:[%s217] sm:$0xff]
        %v872 = vld [vmem:[%s217 + $0x8] sm:$0x1]
        %vm873 = vcmask 72704
        %v875 = vsel %vm873, %v870, 0
        %vm877 = vcmask 1040384
        %v879 = vsel %vm877, %v872, 0
        %881 = vmatprep.subr.mxu0 0.0
        %882 = vmatpush1.msra.mxu0 %v871
        %883 = vmatprep.subr.mxu0 0.0
        %884 = vmatpush1.msra.mxu0 %v879
        %885 = vmatprep.subr.mxu0 0.0
        %886 = vmatpush1.msra.mxu0 0.0
        %887 = vmatprep.subr.mxu0 0.0
        %888 = vmatpush1.msra.mxu0 0.0
        %889 = vmatprep.subr.mxu0 0.0
        %890 = vmatpush1.msra.mxu0 0.0
        %891 = vmatprep.subr.mxu0 0.0
        %892 = vmatpush1.msra.mxu0 0.0
        %893 = vmatprep.subr.mxu0 0.0
        %894 = vmatpush1.msra.mxu0 0.0
        %895 = vmatprep.subr.mxu0 0.0
        %896 = vmatpush1.msra.mxu0 0.0
        %897 = vmatprep.subr.mxu0 0.0
        %898 = vmatpush1.msra.mxu0 0.0
        %899 = vmatprep.subr.mxu0 0.0
        %900 = vmatpush1.msra.mxu0 0.0
        %901 = vmatprep.subr.mxu0 0.0
        %902 = vmatpush1.msra.mxu0 0.0
        %903 = vmatprep.subr.mxu0 0.0
        %904 = vmatpush1.msra.mxu0 0.0
        %905 = vmatprep.subr.mxu0 0.0
        %906 = vmatpush1.msra.mxu0 0.0
        %907 = vmatprep.subr.mxu0 0.0
        %908 = vmatpush1.msra.mxu0 0.0
        %909 = vmatprep.subr.mxu0 0.0
        %910 = vmatpush1.msra.mxu0 0.0
        %911 = vmatprep.subr.mxu0 0.0
        %912 = vmatpush1.msra.mxu0 0.0
        %913 = vmatprep.subr.mxu0 0.0
        %914 = vmatpush1.msra.mxu0 0.0
        %915 = vmatprep.subr.mxu0 0.0
        %916 = vmatpush1.msra.mxu0 0.0
        %917 = vmatprep.subr.mxu0 0.0
        %918 = vmatpush1.msra.mxu0 0.0
        %919 = vmatprep.subr.mxu0 0.0
        %920 = vmatpush1.msra.mxu0 0.0
        %921 = vmatprep.subr.mxu0 0.0
        %922 = vmatpush1.msra.mxu0 0.0
        %923 = vmatprep.subr.mxu0 0.0
        %924 = vmatpush1.msra.mxu0 0.0
        %925 = vmatprep.subr.mxu0 0.0
        %926 = vmatpush1.msra.mxu0 0.0
        %927 = vmatprep.subr.mxu0 0.0
        %928 = vmatpush1.msra.mxu0 0.0
        %929 = vmatprep.subr.mxu0 0.0
        %930 = vmatpush1.msra.mxu0 0.0
        %931 = vmatprep.subr.mxu0 0.0
        %932 = vmatpush1.msra.mxu0 0.0
        %933 = vmatprep.subr.mxu0 0.0
        %934 = vmatpush1.msra.mxu0 0.0
        %935 = vmatprep.subr.mxu0 0.0
        %936 = vmatpush1.msra.mxu0 0.0
        %937 = vmatprep.subr.mxu0 0.0
        %938 = vmatpush1.msra.mxu0 0.0
        %939 = vmatprep.subr.mxu0 0.0
        %940 = vmatpush1.msra.mxu0 0.0
        %941 = vmatprep.subr.mxu0 0.0
        %942 = vmatpush1.msra.mxu0 0.0
        %943 = vmatprep.subr.mxu0 0.0
        %944 = vmatpush1.msra.mxu0 0.0
        %945 = vmatprep.mubr.f32.mxu0 0.0
        %946 = vmatmul.mubr.f32.gmra.mrb[0].mxu0 %v875
        %v947 = vpop.f32.mrb[0].mxu0
        %v948 = vadd.f32 0.0, %v947
        %v949 = vpop.f32.mrb[0].mxu0
        %950 = vdwg.mxu0
        %vm951 = vcmask 261120
        %952 = vst.msk [vmem:[%s200] sm:$0xff] %vm951, %v948
        %s953 = sand.u32 %s97, 1
        %s954 = scalar_lea.sflag [#allocation4], %s953
        %s955 = sand.u32 %s97, 1
        %s956 = smul.addr %s955, 8
        %s957 = scalar_lea.vmem [#allocation3], %s956
        %s958 = sand.u32 %s123, 1
        %s959 = scalar_lea.sflag [#allocation6], %s958
        %s960 = sand.u32 %s123, 1
        %s961 = scalar_lea.vmem [#allocation5], %s960
        // Predicated region
        $region33: #{tpu_custom_call.1} parent=27 // pred_check
          %p962 = pneg %p107
        $region34: #{tpu_custom_call.1} parent=27 // pred_check_branch
          %964 = sbr.rel (%p962) target = $region36
        $region35: #{tpu_custom_call.1} parent=27 // pred_region
          %s966 = ssub.s32 128, 128
          %967 = vsyncadd %s954, %s966
          %s968 = sadd.s32 %s26, %s25
          %s969 = smul.addr %s968, 128
          %s970 = scalar_lea.hbm %s2, %s969
          %s972 = sshll.u32 %s957, 4
          %s973 = int_to_ptr.vmem [resolvable:$true] %s972
          %975 = dma.vmem_to_hbm [thread:$0]  %s973, 128, %s970, %s954
        $region36: #{tpu_custom_call.1} parent=27 // pred_fallthru
          _
        // Predicated region
        $region37: #{tpu_custom_call.1} parent=27 // pred_check
          %p976 = pneg %p133
        $region38: #{tpu_custom_call.1} parent=27 // pred_check_branch
          %978 = sbr.rel (%p976) target = $region40
        $region39: #{tpu_custom_call.1} parent=27 // pred_region
          %s980 = ssub.s32 16, 16
          %981 = vsyncadd %s959, %s980
          %s982 = smul.addr %s25, 16
          %s983 = scalar_lea.hbm %s3, %s982
          %s985 = sshll.u32 %s961, 4
          %s986 = int_to_ptr.vmem [resolvable:$true] %s985
          %988 = dma.vmem_to_hbm [thread:$0]  %s986, 16, %s983, %s959
        $region40: #{tpu_custom_call.1} parent=27 // pred_fallthru
          _
      $region28: #{tpu_custom_call.1} parent=5 // pred_fallthru
        _
      %p989 = scmp.le.s32.totalorder 2, %s16
      // Predicated region
      $region41: #{tpu_custom_call.1} parent=5 // pred_check
        %p990 = pneg %p989
      $region42: #{tpu_custom_call.1} parent=5 // pred_check_branch
        %992 = sbr.rel (%p990) target = $region44
      $region43: #{tpu_custom_call.1} parent=5 // pred_region
        %s993 = ssub.s32 %s16, 2
        // Predicated region
        $region45: #{tpu_custom_call.1} parent=43 // pred_check
          %p994 = pneg %p113
        $region46: #{tpu_custom_call.1} parent=43 // pred_check_branch
          %996 = sbr.rel (%p994) target = $region48
        $region47: #{tpu_custom_call.1} parent=43 // pred_region
          %s997 = sand.u32 %s98, 1
          %s998 = scalar_lea.sflag [#allocation4], %s997
          %s999 = sand.u32 %s98, 1
          %s1000 = smul.addr %s999, 8
          %s1001 = scalar_lea.vmem [#allocation3], %s1000
          %1002 = dma.done %s998, 128
        $region48: #{tpu_custom_call.1} parent=43 // pred_fallthru
          _
        // Predicated region
        $region49: #{tpu_custom_call.1} parent=43 // pred_check
          %p1003 = pneg %p139
        $region50: #{tpu_custom_call.1} parent=43 // pred_check_branch
          %1005 = sbr.rel (%p1003) target = $region52
        $region51: #{tpu_custom_call.1} parent=43 // pred_region
          %s1006 = sand.u32 %s124, 1
          %s1007 = scalar_lea.sflag [#allocation6], %s1006
          %s1008 = sand.u32 %s124, 1
          %s1009 = scalar_lea.vmem [#allocation5], %s1008
          %1010 = dma.done %s1007, 16
        $region52: #{tpu_custom_call.1} parent=43 // pred_fallthru
          _
      $region44: #{tpu_custom_call.1} parent=5 // pred_fallthru
        _
    $region6: #{tpu_custom_call.1} parent=1 // loop_footer
      %s20 = sadd.s32 1, %s16
    $region7: #{tpu_custom_call.1} parent=1 // loop_footer_branch
      %15 = sbr.rel target = $region3
    $region8: #{tpu_custom_call.1} parent=1 // loop_exit
      _
    %1011 = vsyncpa [#allocation4], 1
    %s1012 = scalar_lea.sflag [#allocation4], 1
    %1013 = vsyncpa %s1012, 1
    %1014 = vsyncpa [#allocation6], 1
    %s1015 = scalar_lea.sflag [#allocation6], 1
    %1016 = vsyncpa %s1015, 1

</llo_original>
